<compile_context>
chip_gen: v7x
topology: tpu7x:2x2x1
jax: 0.10.0
libtpu: 0.0.40
codegen_flags: <defaults>
</compile_context>

<pallas_src>
import math

import jax
import jax.numpy as jnp
from jax.experimental import pallas as pl
from jax.experimental.pallas import tpu as pltpu


def _round_up(x, m):
    return (x + m - 1) // m * m


def _make_kernel(NB, C_in, C_out, KH, KW, W_p, L_ext_pad, c_scale):
    T = C_in * KH * KW

    def kernel(x_ref, w_ref, b_ref, o_ref):
        # x_ref: (NB, C_in, L_in)        flattened, replication-padded images
        # w_ref: (C_out, T)              raw (unscaled) f32 weights
        # b_ref: (C_out, 1)              f32 bias
        # o_ref: (NB, C_out, L_ext_pad)  lane-dense extended output
        # Fold the equalized-lr scale into the resident weight once (1 vreg op).
        w = w_ref[...] * c_scale                                # (C_out, T)
        b = b_ref[...]                                          # (C_out, 1)
        # Hoist the nb-invariant weight-column extracts out of the batch loop
        # (JAX does not CSE these; each is a single (C_out, 1) vreg).
        w_cols = [w[:, t:t + 1] for t in range(T)]

        for nb in range(NB):
            acc = jnp.zeros((C_out, L_ext_pad), jnp.float32)
            for ci in range(C_in):
                # Broadcast the flat channel row onto C_out sublanes ONCE per
                # channel, so every tap slice below is already (C_out, L) and
                # the FMA is a plain vmul+vadd (no per-tap sublane broadcast).
                # TODO(synk): a stride-0 sublane-broadcast load
                # (x_ref[nb, pl.ds(ci, C_out, stride=0), :]) would fold this
                # broadcast into the vld itself where supported.
                row = x_ref[nb, ci:ci + 1, :].astype(jnp.float32)     # (1, L_in)
                row8 = jnp.broadcast_to(row, (C_out, row.shape[1]))   # (C_out, L_in)
                for kh in range(KH):
                    for kw in range(KW):
                        off = kh * W_p + kw                    # static flat offset
                        t = (ci * KH + kh) * KW + kw
                        tap = row8[:, off:off + L_ext_pad]     # (C_out, L) contiguous
                        acc = acc + w_cols[t] * tap            # VPU outer-product FMA
            o_ref[nb] = (acc + b).astype(o_ref.dtype)

    return kernel


def equalized_conv2d(x_nchw, weight_oihw, bias, *, padding=0, stride=1):
    """Forward pass of EqualizedConv2d.

    x_nchw:      (N, C_in, H, W)      (f32 or bf16)
    weight_oihw: (C_out, C_in, KH, KW) raw (unscaled) weight, as in the module
    bias:        (C_out,)
    """
    N, C_in, H, W = x_nchw.shape
    C_out, C_in_w, KH, KW = weight_oihw.shape
    assert C_in == C_in_w
    assert stride >= 1

    c_scale = 1.0 / math.sqrt(C_in * KH * KW)

    H_p, W_p = H + 2 * padding, W + 2 * padding
    H_d = H_p - KH + 1                 # dense (stride-1) output rows
    W_d = W_p - KW + 1
    assert H_d >= 1 and W_d >= 1

    # Lane-dense extended output: W_p columns per output row, rounded up to a
    # multiple of 128 so every output store is an unmasked full-vreg vst.
    L_ext = H_d * W_p
    L_ext_pad = _round_up(L_ext, 128)
    max_off = (KH - 1) * W_p + (KW - 1)          # largest static tap offset
    L_in = _round_up(max_off + L_ext_pad, 128)   # lane-aligned flat input length

    # Replication pad directly in NCHW (no transpose), flatten spatial, zero the
    # tail.  All valid taps land inside the real H_p*W_p data, so the zero tail
    # never contaminates valid outputs.
    # TODO(synk): fuse the edge pad + tail pad (or pull replication padding into
    # the kernel) to save one full HBM pass at large spatial sizes.
    x_pad = jnp.pad(
        x_nchw, ((0, 0), (0, 0), (padding, padding), (padding, padding)),
        mode="edge")
    x_flat = x_pad.reshape(N, C_in, H_p * W_p)
    x_flat = jnp.pad(x_flat, ((0, 0), (0, 0), (0, L_in - H_p * W_p)))

    # Keep weight/bias in f32 regardless of activation dtype (they are tiny and
    # the PyTorch module keeps them f32); activations may be bf16.
    w2 = weight_oihw.reshape(C_out, C_in * KH * KW).astype(jnp.float32)
    b2 = bias.reshape(C_out, 1).astype(jnp.float32)

    # Batch block per grid step.  Budget counts input AND output blocks with the
    # x2 double-buffer factor, and keeps >=2 grid steps so both v7x TensorCores
    # get work (and the pipeliner has something to overlap).
    in_item = jnp.dtype(x_flat.dtype).itemsize
    out_item = jnp.dtype(x_nchw.dtype).itemsize
    block_budget = 12 << 20
    NB = 1
    for cand in (8, 4, 2, 1):
        if N % cand != 0:
            continue
        if N > 1 and N // cand < 2:
            continue                               # keep at least 2 grid steps
        blk = 2 * cand * (C_in * L_in * in_item + C_out * L_ext_pad * out_item)
        if blk <= block_budget:
            NB = cand
            break

    kernel = _make_kernel(NB, C_in, C_out, KH, KW, W_p, L_ext_pad, c_scale)

    out_flat = pl.pallas_call(
        kernel,
        out_shape=jax.ShapeDtypeStruct((N, C_out, L_ext_pad), x_nchw.dtype),
        grid_spec=pltpu.PrefetchScalarGridSpec(
            num_scalar_prefetch=0,
            grid=(N // NB,),
            in_specs=[
                pl.BlockSpec((NB, C_in, L_in), lambda n: (n, 0, 0)),
                pl.BlockSpec((C_out, C_in * KH * KW), lambda n: (0, 0)),
                pl.BlockSpec((C_out, 1), lambda n: (0, 0)),
            ],
            out_specs=pl.BlockSpec((NB, C_out, L_ext_pad), lambda n: (n, 0, 0)),
        ),
        compiler_params=pltpu.CompilerParams(
            dimension_semantics=("parallel",),
            vmem_limit_bytes=32 << 20,
        ),
    )(x_flat, w2, b2)

    # Drop the lane padding + the KW-1 wrap-around columns per output row ->
    # dense stride-1 conv, already in NCHW order.
    # TODO(synk): this slice is one extra HBM pass over the output; fold it into
    # the consumer (or emit row-tiled output) for very large images.
    out = out_flat[:, :, :L_ext].reshape(N, C_out, H_d, W_p)[:, :, :, :W_d]
    if stride > 1:
        # TODO(synk): stride>1 computes the dense stride-1 conv and subsamples;
        # a dedicated strided-tap kernel would avoid the ~stride^2 extra work.
        out = out[:, :, ::stride, ::stride]
    return out


if __name__ == "__main__":
    # Module config: in_features=4, out_features=8, kernel_size=3, padding=1, stride=1
    in_features, out_features, kernel_size, padding, stride = 4, 8, 3, 1, 1
    N, H, W = 2, 16, 16

    key = jax.random.PRNGKey(0)
    kx, kw_, kb = jax.random.split(key, 3)
    x = jax.random.normal(kx, (N, in_features, H, W), dtype=jnp.float32)
    weight = jax.random.normal(
        kw_, (out_features, in_features, kernel_size, kernel_size),
        dtype=jnp.float32)
    bias = jax.random.normal(kb, (out_features,), dtype=jnp.float32)

    out = equalized_conv2d(x, weight, bias, padding=padding, stride=stride)
    out = jax.block_until_ready(out)

    # Pure-JAX reference: replication pad + conv2d(weight * c) + bias.
    c = 1.0 / math.sqrt(in_features * kernel_size * kernel_size)
    x_pad_ref = jnp.pad(x, ((0, 0), (0, 0), (padding, padding), (padding, padding)),
                        mode="edge")
    ref = jax.lax.conv_general_dilated(
        x_pad_ref, weight * c, window_strides=(stride, stride), padding="VALID",
        dimension_numbers=("NCHW", "OIHW", "NCHW"),
    ) + bias.reshape(1, out_features, 1, 1)

    assert out.shape == (N, out_features, H, W), out.shape
    assert out.shape == ref.shape, (out.shape, ref.shape)
    assert jnp.allclose(out, ref, atol=1e-4, rtol=1e-4), float(
        jnp.max(jnp.abs(out - ref)))
    print("KERNEL_OK")
</pallas_src>

<mosaic_0001>
module attributes {stable_mosaic.version = 11 : i64} {
  func.func @kernel(%arg0: i32, %arg1: memref<1x4x512xf32, #tpu.memory_space<vmem>>, %arg2: memref<8x36xf32, #tpu.memory_space<vmem>>, %arg3: memref<8x1xf32, #tpu.memory_space<vmem>>, %arg4: memref<1x8x384xf32, #tpu.memory_space<vmem>>) attributes {dimension_semantics = [#tpu.dimension_semantics<parallel>], iteration_bounds = array<i64: 2>, scalar_prefetch = 0 : i64, scratch_operands = 0 : i64, tpu.core_type = #tpu.core_type<tc>, window_params = [{transform_indices = @transform_0, window_bounds = array<i64: 1, 4, 512>}, {pipeline_mode = #tpu.pipeline_mode<synchronous>, transform_indices = @transform_1, window_bounds = array<i64: 8, 36>}, {pipeline_mode = #tpu.pipeline_mode<synchronous>, transform_indices = @transform_2, window_bounds = array<i64: 8, 1>}, {transform_indices = @transform_3, window_bounds = array<i64: 1, 8, 384>}]} {
    %c0 = arith.constant 0 : index
    %c0_0 = arith.constant 0 : index
    %0 = vector.load %arg2[%c0, %c0_0] : memref<8x36xf32, #tpu.memory_space<vmem>>, vector<8x36xf32>
    %cst = arith.constant 0.166666672 : f32
    %1 = vector.broadcast %cst : f32 to vector<8x36xf32>
    %2 = arith.mulf %0, %1 : vector<8x36xf32>
    %c0_1 = arith.constant 0 : index
    %c0_2 = arith.constant 0 : index
    %3 = vector.load %arg3[%c0_1, %c0_2] : memref<8x1xf32, #tpu.memory_space<vmem>>, vector<8x1xf32>
    %4 = vector.extract_strided_slice %2 {offsets = [0, 0], sizes = [8, 1], strides = [1, 1]} : vector<8x36xf32> to vector<8x1xf32>
    %5 = vector.extract_strided_slice %2 {offsets = [0, 1], sizes = [8, 1], strides = [1, 1]} : vector<8x36xf32> to vector<8x1xf32>
    %6 = vector.extract_strided_slice %2 {offsets = [0, 2], sizes = [8, 1], strides = [1, 1]} : vector<8x36xf32> to vector<8x1xf32>
    %7 = vector.extract_strided_slice %2 {offsets = [0, 3], sizes = [8, 1], strides = [1, 1]} : vector<8x36xf32> to vector<8x1xf32>
    %8 = vector.extract_strided_slice %2 {offsets = [0, 4], sizes = [8, 1], strides = [1, 1]} : vector<8x36xf32> to vector<8x1xf32>
    %9 = vector.extract_strided_slice %2 {offsets = [0, 5], sizes = [8, 1], strides = [1, 1]} : vector<8x36xf32> to vector<8x1xf32>
    %10 = vector.extract_strided_slice %2 {offsets = [0, 6], sizes = [8, 1], strides = [1, 1]} : vector<8x36xf32> to vector<8x1xf32>
    %11 = vector.extract_strided_slice %2 {offsets = [0, 7], sizes = [8, 1], strides = [1, 1]} : vector<8x36xf32> to vector<8x1xf32>
    %12 = vector.extract_strided_slice %2 {offsets = [0, 8], sizes = [8, 1], strides = [1, 1]} : vector<8x36xf32> to vector<8x1xf32>
    %13 = vector.extract_strided_slice %2 {offsets = [0, 9], sizes = [8, 1], strides = [1, 1]} : vector<8x36xf32> to vector<8x1xf32>
    %14 = vector.extract_strided_slice %2 {offsets = [0, 10], sizes = [8, 1], strides = [1, 1]} : vector<8x36xf32> to vector<8x1xf32>
    %15 = vector.extract_strided_slice %2 {offsets = [0, 11], sizes = [8, 1], strides = [1, 1]} : vector<8x36xf32> to vector<8x1xf32>
    %16 = vector.extract_strided_slice %2 {offsets = [0, 12], sizes = [8, 1], strides = [1, 1]} : vector<8x36xf32> to vector<8x1xf32>
    %17 = vector.extract_strided_slice %2 {offsets = [0, 13], sizes = [8, 1], strides = [1, 1]} : vector<8x36xf32> to vector<8x1xf32>
    %18 = vector.extract_strided_slice %2 {offsets = [0, 14], sizes = [8, 1], strides = [1, 1]} : vector<8x36xf32> to vector<8x1xf32>
    %19 = vector.extract_strided_slice %2 {offsets = [0, 15], sizes = [8, 1], strides = [1, 1]} : vector<8x36xf32> to vector<8x1xf32>
    %20 = vector.extract_strided_slice %2 {offsets = [0, 16], sizes = [8, 1], strides = [1, 1]} : vector<8x36xf32> to vector<8x1xf32>
    %21 = vector.extract_strided_slice %2 {offsets = [0, 17], sizes = [8, 1], strides = [1, 1]} : vector<8x36xf32> to vector<8x1xf32>
    %22 = vector.extract_strided_slice %2 {offsets = [0, 18], sizes = [8, 1], strides = [1, 1]} : vector<8x36xf32> to vector<8x1xf32>
    %23 = vector.extract_strided_slice %2 {offsets = [0, 19], sizes = [8, 1], strides = [1, 1]} : vector<8x36xf32> to vector<8x1xf32>
    %24 = vector.extract_strided_slice %2 {offsets = [0, 20], sizes = [8, 1], strides = [1, 1]} : vector<8x36xf32> to vector<8x1xf32>
    %25 = vector.extract_strided_slice %2 {offsets = [0, 21], sizes = [8, 1], strides = [1, 1]} : vector<8x36xf32> to vector<8x1xf32>
    %26 = vector.extract_strided_slice %2 {offsets = [0, 22], sizes = [8, 1], strides = [1, 1]} : vector<8x36xf32> to vector<8x1xf32>
    %27 = vector.extract_strided_slice %2 {offsets = [0, 23], sizes = [8, 1], strides = [1, 1]} : vector<8x36xf32> to vector<8x1xf32>
    %28 = vector.extract_strided_slice %2 {offsets = [0, 24], sizes = [8, 1], strides = [1, 1]} : vector<8x36xf32> to vector<8x1xf32>
    %29 = vector.extract_strided_slice %2 {offsets = [0, 25], sizes = [8, 1], strides = [1, 1]} : vector<8x36xf32> to vector<8x1xf32>
    %30 = vector.extract_strided_slice %2 {offsets = [0, 26], sizes = [8, 1], strides = [1, 1]} : vector<8x36xf32> to vector<8x1xf32>
    %31 = vector.extract_strided_slice %2 {offsets = [0, 27], sizes = [8, 1], strides = [1, 1]} : vector<8x36xf32> to vector<8x1xf32>
    %32 = vector.extract_strided_slice %2 {offsets = [0, 28], sizes = [8, 1], strides = [1, 1]} : vector<8x36xf32> to vector<8x1xf32>
    %33 = vector.extract_strided_slice %2 {offsets = [0, 29], sizes = [8, 1], strides = [1, 1]} : vector<8x36xf32> to vector<8x1xf32>
    %34 = vector.extract_strided_slice %2 {offsets = [0, 30], sizes = [8, 1], strides = [1, 1]} : vector<8x36xf32> to vector<8x1xf32>
    %35 = vector.extract_strided_slice %2 {offsets = [0, 31], sizes = [8, 1], strides = [1, 1]} : vector<8x36xf32> to vector<8x1xf32>
    %36 = vector.extract_strided_slice %2 {offsets = [0, 32], sizes = [8, 1], strides = [1, 1]} : vector<8x36xf32> to vector<8x1xf32>
    %37 = vector.extract_strided_slice %2 {offsets = [0, 33], sizes = [8, 1], strides = [1, 1]} : vector<8x36xf32> to vector<8x1xf32>
    %38 = vector.extract_strided_slice %2 {offsets = [0, 34], sizes = [8, 1], strides = [1, 1]} : vector<8x36xf32> to vector<8x1xf32>
    %39 = vector.extract_strided_slice %2 {offsets = [0, 35], sizes = [8, 1], strides = [1, 1]} : vector<8x36xf32> to vector<8x1xf32>
    %cst_3 = arith.constant 0.000000e+00 : f32
    %40 = vector.broadcast %cst_3 : f32 to vector<8x384xf32>
    %c0_4 = arith.constant 0 : index
    %c0_5 = arith.constant 0 : index
    %c0_6 = arith.constant 0 : index
    %41 = vector.load %arg1[%c0_4, %c0_5, %c0_6] : memref<1x4x512xf32, #tpu.memory_space<vmem>>, vector<1x1x512xf32>
    %42 = vector.shape_cast %41 : vector<1x1x512xf32> to vector<1x512xf32>
    %43 = vector.shape_cast %42 : vector<1x512xf32> to vector<1x512xf32>
    %44 = vector.broadcast %43 : vector<1x512xf32> to vector<8x512xf32>
    %45 = vector.extract_strided_slice %44 {offsets = [0, 0], sizes = [8, 384], strides = [1, 1]} : vector<8x512xf32> to vector<8x384xf32>
    %46 = vector.broadcast %4 : vector<8x1xf32> to vector<8x384xf32>
    %47 = arith.mulf %46, %45 : vector<8x384xf32>
    %48 = arith.addf %40, %47 : vector<8x384xf32>
    %49 = vector.extract_strided_slice %44 {offsets = [0, 1], sizes = [8, 384], strides = [1, 1]} : vector<8x512xf32> to vector<8x384xf32>
    %50 = vector.broadcast %5 : vector<8x1xf32> to vector<8x384xf32>
    %51 = arith.mulf %50, %49 : vector<8x384xf32>
    %52 = arith.addf %48, %51 : vector<8x384xf32>
    %53 = vector.extract_strided_slice %44 {offsets = [0, 2], sizes = [8, 384], strides = [1, 1]} : vector<8x512xf32> to vector<8x384xf32>
    %54 = vector.broadcast %6 : vector<8x1xf32> to vector<8x384xf32>
    %55 = arith.mulf %54, %53 : vector<8x384xf32>
    %56 = arith.addf %52, %55 : vector<8x384xf32>
    %57 = vector.extract_strided_slice %44 {offsets = [0, 18], sizes = [8, 384], strides = [1, 1]} : vector<8x512xf32> to vector<8x384xf32>
    %58 = vector.broadcast %7 : vector<8x1xf32> to vector<8x384xf32>
    %59 = arith.mulf %58, %57 : vector<8x384xf32>
    %60 = arith.addf %56, %59 : vector<8x384xf32>
    %61 = vector.extract_strided_slice %44 {offsets = [0, 19], sizes = [8, 384], strides = [1, 1]} : vector<8x512xf32> to vector<8x384xf32>
    %62 = vector.broadcast %8 : vector<8x1xf32> to vector<8x384xf32>
    %63 = arith.mulf %62, %61 : vector<8x384xf32>
    %64 = arith.addf %60, %63 : vector<8x384xf32>
    %65 = vector.extract_strided_slice %44 {offsets = [0, 20], sizes = [8, 384], strides = [1, 1]} : vector<8x512xf32> to vector<8x384xf32>
    %66 = vector.broadcast %9 : vector<8x1xf32> to vector<8x384xf32>
    %67 = arith.mulf %66, %65 : vector<8x384xf32>
    %68 = arith.addf %64, %67 : vector<8x384xf32>
    %69 = vector.extract_strided_slice %44 {offsets = [0, 36], sizes = [8, 384], strides = [1, 1]} : vector<8x512xf32> to vector<8x384xf32>
    %70 = vector.broadcast %10 : vector<8x1xf32> to vector<8x384xf32>
    %71 = arith.mulf %70, %69 : vector<8x384xf32>
    %72 = arith.addf %68, %71 : vector<8x384xf32>
    %73 = vector.extract_strided_slice %44 {offsets = [0, 37], sizes = [8, 384], strides = [1, 1]} : vector<8x512xf32> to vector<8x384xf32>
    %74 = vector.broadcast %11 : vector<8x1xf32> to vector<8x384xf32>
    %75 = arith.mulf %74, %73 : vector<8x384xf32>
    %76 = arith.addf %72, %75 : vector<8x384xf32>
    %77 = vector.extract_strided_slice %44 {offsets = [0, 38], sizes = [8, 384], strides = [1, 1]} : vector<8x512xf32> to vector<8x384xf32>
    %78 = vector.broadcast %12 : vector<8x1xf32> to vector<8x384xf32>
    %79 = arith.mulf %78, %77 : vector<8x384xf32>
    %80 = arith.addf %76, %79 : vector<8x384xf32>
    %c0_7 = arith.constant 0 : index
    %c1 = arith.constant 1 : index
    %c0_8 = arith.constant 0 : index
    %81 = vector.load %arg1[%c0_7, %c1, %c0_8] : memref<1x4x512xf32, #tpu.memory_space<vmem>>, vector<1x1x512xf32>
    %82 = vector.shape_cast %81 : vector<1x1x512xf32> to vector<1x512xf32>
    %83 = vector.shape_cast %82 : vector<1x512xf32> to vector<1x512xf32>
    %84 = vector.broadcast %83 : vector<1x512xf32> to vector<8x512xf32>
    %85 = vector.extract_strided_slice %84 {offsets = [0, 0], sizes = [8, 384], strides = [1, 1]} : vector<8x512xf32> to vector<8x384xf32>
    %86 = vector.broadcast %13 : vector<8x1xf32> to vector<8x384xf32>
    %87 = arith.mulf %86, %85 : vector<8x384xf32>
    %88 = arith.addf %80, %87 : vector<8x384xf32>
    %89 = vector.extract_strided_slice %84 {offsets = [0, 1], sizes = [8, 384], strides = [1, 1]} : vector<8x512xf32> to vector<8x384xf32>
    %90 = vector.broadcast %14 : vector<8x1xf32> to vector<8x384xf32>
    %91 = arith.mulf %90, %89 : vector<8x384xf32>
    %92 = arith.addf %88, %91 : vector<8x384xf32>
    %93 = vector.extract_strided_slice %84 {offsets = [0, 2], sizes = [8, 384], strides = [1, 1]} : vector<8x512xf32> to vector<8x384xf32>
    %94 = vector.broadcast %15 : vector<8x1xf32> to vector<8x384xf32>
    %95 = arith.mulf %94, %93 : vector<8x384xf32>
    %96 = arith.addf %92, %95 : vector<8x384xf32>
    %97 = vector.extract_strided_slice %84 {offsets = [0, 18], sizes = [8, 384], strides = [1, 1]} : vector<8x512xf32> to vector<8x384xf32>
    %98 = vector.broadcast %16 : vector<8x1xf32> to vector<8x384xf32>
    %99 = arith.mulf %98, %97 : vector<8x384xf32>
    %100 = arith.addf %96, %99 : vector<8x384xf32>
    %101 = vector.extract_strided_slice %84 {offsets = [0, 19], sizes = [8, 384], strides = [1, 1]} : vector<8x512xf32> to vector<8x384xf32>
    %102 = vector.broadcast %17 : vector<8x1xf32> to vector<8x384xf32>
    %103 = arith.mulf %102, %101 : vector<8x384xf32>
    %104 = arith.addf %100, %103 : vector<8x384xf32>
    %105 = vector.extract_strided_slice %84 {offsets = [0, 20], sizes = [8, 384], strides = [1, 1]} : vector<8x512xf32> to vector<8x384xf32>
    %106 = vector.broadcast %18 : vector<8x1xf32> to vector<8x384xf32>
    %107 = arith.mulf %106, %105 : vector<8x384xf32>
    %108 = arith.addf %104, %107 : vector<8x384xf32>
    %109 = vector.extract_strided_slice %84 {offsets = [0, 36], sizes = [8, 384], strides = [1, 1]} : vector<8x512xf32> to vector<8x384xf32>
    %110 = vector.broadcast %19 : vector<8x1xf32> to vector<8x384xf32>
    %111 = arith.mulf %110, %109 : vector<8x384xf32>
    %112 = arith.addf %108, %111 : vector<8x384xf32>
    %113 = vector.extract_strided_slice %84 {offsets = [0, 37], sizes = [8, 384], strides = [1, 1]} : vector<8x512xf32> to vector<8x384xf32>
    %114 = vector.broadcast %20 : vector<8x1xf32> to vector<8x384xf32>
    %115 = arith.mulf %114, %113 : vector<8x384xf32>
    %116 = arith.addf %112, %115 : vector<8x384xf32>
    %117 = vector.extract_strided_slice %84 {offsets = [0, 38], sizes = [8, 384], strides = [1, 1]} : vector<8x512xf32> to vector<8x384xf32>
    %118 = vector.broadcast %21 : vector<8x1xf32> to vector<8x384xf32>
    %119 = arith.mulf %118, %117 : vector<8x384xf32>
    %120 = arith.addf %116, %119 : vector<8x384xf32>
    %c0_9 = arith.constant 0 : index
    %c2 = arith.constant 2 : index
    %c0_10 = arith.constant 0 : index
    %121 = vector.load %arg1[%c0_9, %c2, %c0_10] : memref<1x4x512xf32, #tpu.memory_space<vmem>>, vector<1x1x512xf32>
    %122 = vector.shape_cast %121 : vector<1x1x512xf32> to vector<1x512xf32>
    %123 = vector.shape_cast %122 : vector<1x512xf32> to vector<1x512xf32>
    %124 = vector.broadcast %123 : vector<1x512xf32> to vector<8x512xf32>
    %125 = vector.extract_strided_slice %124 {offsets = [0, 0], sizes = [8, 384], strides = [1, 1]} : vector<8x512xf32> to vector<8x384xf32>
    %126 = vector.broadcast %22 : vector<8x1xf32> to vector<8x384xf32>
    %127 = arith.mulf %126, %125 : vector<8x384xf32>
    %128 = arith.addf %120, %127 : vector<8x384xf32>
    %129 = vector.extract_strided_slice %124 {offsets = [0, 1], sizes = [8, 384], strides = [1, 1]} : vector<8x512xf32> to vector<8x384xf32>
    %130 = vector.broadcast %23 : vector<8x1xf32> to vector<8x384xf32>
    %131 = arith.mulf %130, %129 : vector<8x384xf32>
    %132 = arith.addf %128, %131 : vector<8x384xf32>
    %133 = vector.extract_strided_slice %124 {offsets = [0, 2], sizes = [8, 384], strides = [1, 1]} : vector<8x512xf32> to vector<8x384xf32>
    %134 = vector.broadcast %24 : vector<8x1xf32> to vector<8x384xf32>
    %135 = arith.mulf %134, %133 : vector<8x384xf32>
    %136 = arith.addf %132, %135 : vector<8x384xf32>
    %137 = vector.extract_strided_slice %124 {offsets = [0, 18], sizes = [8, 384], strides = [1, 1]} : vector<8x512xf32> to vector<8x384xf32>
    %138 = vector.broadcast %25 : vector<8x1xf32> to vector<8x384xf32>
    %139 = arith.mulf %138, %137 : vector<8x384xf32>
    %140 = arith.addf %136, %139 : vector<8x384xf32>
    %141 = vector.extract_strided_slice %124 {offsets = [0, 19], sizes = [8, 384], strides = [1, 1]} : vector<8x512xf32> to vector<8x384xf32>
    %142 = vector.broadcast %26 : vector<8x1xf32> to vector<8x384xf32>
    %143 = arith.mulf %142, %141 : vector<8x384xf32>
    %144 = arith.addf %140, %143 : vector<8x384xf32>
    %145 = vector.extract_strided_slice %124 {offsets = [0, 20], sizes = [8, 384], strides = [1, 1]} : vector<8x512xf32> to vector<8x384xf32>
    %146 = vector.broadcast %27 : vector<8x1xf32> to vector<8x384xf32>
    %147 = arith.mulf %146, %145 : vector<8x384xf32>
    %148 = arith.addf %144, %147 : vector<8x384xf32>
    %149 = vector.extract_strided_slice %124 {offsets = [0, 36], sizes = [8, 384], strides = [1, 1]} : vector<8x512xf32> to vector<8x384xf32>
    %150 = vector.broadcast %28 : vector<8x1xf32> to vector<8x384xf32>
    %151 = arith.mulf %150, %149 : vector<8x384xf32>
    %152 = arith.addf %148, %151 : vector<8x384xf32>
    %153 = vector.extract_strided_slice %124 {offsets = [0, 37], sizes = [8, 384], strides = [1, 1]} : vector<8x512xf32> to vector<8x384xf32>
    %154 = vector.broadcast %29 : vector<8x1xf32> to vector<8x384xf32>
    %155 = arith.mulf %154, %153 : vector<8x384xf32>
    %156 = arith.addf %152, %155 : vector<8x384xf32>
    %157 = vector.extract_strided_slice %124 {offsets = [0, 38], sizes = [8, 384], strides = [1, 1]} : vector<8x512xf32> to vector<8x384xf32>
    %158 = vector.broadcast %30 : vector<8x1xf32> to vector<8x384xf32>
    %159 = arith.mulf %158, %157 : vector<8x384xf32>
    %160 = arith.addf %156, %159 : vector<8x384xf32>
    %c0_11 = arith.constant 0 : index
    %c3 = arith.constant 3 : index
    %c0_12 = arith.constant 0 : index
    %161 = vector.load %arg1[%c0_11, %c3, %c0_12] : memref<1x4x512xf32, #tpu.memory_space<vmem>>, vector<1x1x512xf32>
    %162 = vector.shape_cast %161 : vector<1x1x512xf32> to vector<1x512xf32>
    %163 = vector.shape_cast %162 : vector<1x512xf32> to vector<1x512xf32>
    %164 = vector.broadcast %163 : vector<1x512xf32> to vector<8x512xf32>
    %165 = vector.extract_strided_slice %164 {offsets = [0, 0], sizes = [8, 384], strides = [1, 1]} : vector<8x512xf32> to vector<8x384xf32>
    %166 = vector.broadcast %31 : vector<8x1xf32> to vector<8x384xf32>
    %167 = arith.mulf %166, %165 : vector<8x384xf32>
    %168 = arith.addf %160, %167 : vector<8x384xf32>
    %169 = vector.extract_strided_slice %164 {offsets = [0, 1], sizes = [8, 384], strides = [1, 1]} : vector<8x512xf32> to vector<8x384xf32>
    %170 = vector.broadcast %32 : vector<8x1xf32> to vector<8x384xf32>
    %171 = arith.mulf %170, %169 : vector<8x384xf32>
    %172 = arith.addf %168, %171 : vector<8x384xf32>
    %173 = vector.extract_strided_slice %164 {offsets = [0, 2], sizes = [8, 384], strides = [1, 1]} : vector<8x512xf32> to vector<8x384xf32>
    %174 = vector.broadcast %33 : vector<8x1xf32> to vector<8x384xf32>
    %175 = arith.mulf %174, %173 : vector<8x384xf32>
    %176 = arith.addf %172, %175 : vector<8x384xf32>
    %177 = vector.extract_strided_slice %164 {offsets = [0, 18], sizes = [8, 384], strides = [1, 1]} : vector<8x512xf32> to vector<8x384xf32>
    %178 = vector.broadcast %34 : vector<8x1xf32> to vector<8x384xf32>
    %179 = arith.mulf %178, %177 : vector<8x384xf32>
    %180 = arith.addf %176, %179 : vector<8x384xf32>
    %181 = vector.extract_strided_slice %164 {offsets = [0, 19], sizes = [8, 384], strides = [1, 1]} : vector<8x512xf32> to vector<8x384xf32>
    %182 = vector.broadcast %35 : vector<8x1xf32> to vector<8x384xf32>
    %183 = arith.mulf %182, %181 : vector<8x384xf32>
    %184 = arith.addf %180, %183 : vector<8x384xf32>
    %185 = vector.extract_strided_slice %164 {offsets = [0, 20], sizes = [8, 384], strides = [1, 1]} : vector<8x512xf32> to vector<8x384xf32>
    %186 = vector.broadcast %36 : vector<8x1xf32> to vector<8x384xf32>
    %187 = arith.mulf %186, %185 : vector<8x384xf32>
    %188 = arith.addf %184, %187 : vector<8x384xf32>
    %189 = vector.extract_strided_slice %164 {offsets = [0, 36], sizes = [8, 384], strides = [1, 1]} : vector<8x512xf32> to vector<8x384xf32>
    %190 = vector.broadcast %37 : vector<8x1xf32> to vector<8x384xf32>
    %191 = arith.mulf %190, %189 : vector<8x384xf32>
    %192 = arith.addf %188, %191 : vector<8x384xf32>
    %193 = vector.extract_strided_slice %164 {offsets = [0, 37], sizes = [8, 384], strides = [1, 1]} : vector<8x512xf32> to vector<8x384xf32>
    %194 = vector.broadcast %38 : vector<8x1xf32> to vector<8x384xf32>
    %195 = arith.mulf %194, %193 : vector<8x384xf32>
    %196 = arith.addf %192, %195 : vector<8x384xf32>
    %197 = vector.extract_strided_slice %164 {offsets = [0, 38], sizes = [8, 384], strides = [1, 1]} : vector<8x512xf32> to vector<8x384xf32>
    %198 = vector.broadcast %39 : vector<8x1xf32> to vector<8x384xf32>
    %199 = arith.mulf %198, %197 : vector<8x384xf32>
    %200 = arith.addf %196, %199 : vector<8x384xf32>
    %201 = vector.broadcast %3 : vector<8x1xf32> to vector<8x384xf32>
    %202 = arith.addf %200, %201 : vector<8x384xf32>
    %c0_13 = arith.constant 0 : index
    %c0_14 = arith.constant 0 : index
    %c0_15 = arith.constant 0 : index
    %203 = vector.load %arg4[%c0_13, %c0_14, %c0_15] : memref<1x8x384xf32, #tpu.memory_space<vmem>>, vector<1x8x384xf32>
    %204 = vector.shape_cast %203 : vector<1x8x384xf32> to vector<8x384xf32>
    %205 = vector.shape_cast %202 : vector<8x384xf32> to vector<1x8x384xf32>
    tpu.vector_store %arg4[%c0_13, %c0_14, %c0_15], %205 {strides = array<i32>} : memref<1x8x384xf32, #tpu.memory_space<vmem>>, vector<1x8x384xf32>,
    return
  }
  func.func @transform_0(%arg0: i32) -> (i32, i32, i32) {
    %c0_i32 = arith.constant 0 : i32
    %c0_i32_0 = arith.constant 0 : i32
    %c0_i32_1 = arith.constant 0 : i32
    return %arg0, %c0_i32, %c0_i32_0 : i32, i32, i32
  }
  func.func @transform_1(%arg0: i32) -> (i32, i32) {
    %c0_i32 = arith.constant 0 : i32
    %c0_i32_0 = arith.constant 0 : i32
    %c0_i32_1 = arith.constant 0 : i32
    return %c0_i32, %c0_i32_0 : i32, i32
  }
  func.func @transform_2(%arg0: i32) -> (i32, i32) {
    %c0_i32 = arith.constant 0 : i32
    %c0_i32_0 = arith.constant 0 : i32
    %c0_i32_1 = arith.constant 0 : i32
    return %c0_i32, %c0_i32_0 : i32, i32
  }
  func.func @transform_3(%arg0: i32) -> (i32, i32, i32) {
    %c0_i32 = arith.constant 0 : i32
    %c0_i32_0 = arith.constant 0 : i32
    %c0_i32_1 = arith.constant 0 : i32
    return %arg0, %c0_i32, %c0_i32_0 : i32, i32, i32
  }
}

</mosaic_0001>

<llo_original>
// kernel: tpu_custom_call.1
$region0: #{tpu_custom_call.1}
  #allocation0 [shape = 'u32[]', space=smem, size = 0x4, offset = 0x4, fixed_abs, tag = 'smem constant byte address 0x4 - core index']
  #allocation1 [shape = 'u32[144,128]{1,0:T(1,128)}', space=vmem, size = 0x12000, scoped, tag = 'internal scratch']
  %s0 = inlined_call_operand.hbm [shape: f32[2,4,512], index: 0, kind: input, shape index: {}]
  %s1 = inlined_call_operand.vmem [shape: f32[8,36], index: 1, kind: input, shape index: {}]
  %s2 = inlined_call_operand.vmem [shape: f32[8,1], index: 2, kind: input, shape index: {}]
  %s3 = inlined_call_operand.hbm [shape: f32[2,8,384], index: 3, kind: output, shape index: {}]
  %s4 = sld [smem:[#allocation0]]
  $region49: #{tpu_custom_call.1} parent=0
    _
  %s6 = ssub.s32 1, %s4
  %s7 = scalar_select 0, %s6, %s4
  $region1: #{tpu_custom_call.1} parent=0
    #allocation2 [shape = 'u8[16384]{0}', space=vmem, size = 0x4000, scoped, tag = 'input window, operand 0']
    #allocation3 [shape = 's32[2]{0}', space=sflag, size = 0x8, scoped, tag = 'scoped memory for tpu_custom_call.1']
    #allocation4 [shape = 's32[2]{0}', space=sflag, size = 0x8, scoped, tag = 'scoped memory for tpu_custom_call.1']
    #allocation5 [shape = 'u8[24576]{0}', space=vmem, size = 0x6000, scoped, tag = 'output window, operand 0']
    %8 = vsyncpa [#allocation3], 0
    %s9 = scalar_lea.sflag [#allocation3], 1
    %10 = vsyncpa %s9, 0
    %11 = vsyncpa [#allocation4], 0
    %s12 = scalar_lea.sflag [#allocation4], 1
    %13 = vsyncpa %s12, 0
    loop: start=0, step=1, limit=4
    $region2: #{tpu_custom_call.1} parent=1 // loop_pre_header
      _
    $region3: #{tpu_custom_call.1} parent=1 // loop_header
      %s15 = sphi 0, %s19
      %p16 = scmp.ge.s32.totalorder %s15, 4
      %s25 = sphi 0, %s27
      %s28 = sphi 0, %s25
      %s29 = sphi 0, %s28
      %s45 = sphi 0, %s29
      %s49 = sphi 0, %s49
      %s51 = sphi 0, %s49
      %s52 = sphi 0, %s51
      %s66 = sphi 0, %s52
      %s70 = sphi 0, %s70
      %s72 = sphi 0, %s70
      %s73 = sphi 0, %s72
      %s87 = sphi 0, %s73
      %s93 = sphi 0, %s95
      %s96 = sphi 0, %s93
      %s97 = sphi 0, %s96
      %s113 = sphi 0, %s97
    $region4: #{tpu_custom_call.1} parent=1 // loop_header_branch
      %18 = sbr.rel (%p16) target = $region8
    $region5: #{tpu_custom_call.1} parent=1 // loop_body
      %s20 = ssub.s32 %s15, 1
      %s21 = ssub.s32 %s15, 2
      %s22 = sadd.s32 %s15, 1
      %s23 = ssub.s32 %s15, %s22
      %p24 = scmp.eq.s32.totalorder %s23, 0
      %s26 = sadd.s32 %s25, 1
      %s27 = scalar_select %p24, %s25, %s26
      %p30 = pneg %p24
      %p31 = scmp.eq.s32.totalorder %s15, 1
      %p32 = por %p30, %p31
      %p33 = scmp.ne.s32.totalorder %s25, %s28
      %p34 = scmp.eq.s32.totalorder %s15, 0
      %p35 = por %p33, %p34
      %p36 = scmp.ne.s32.totalorder %s25, %s28
      %p37 = scmp.eq.s32.totalorder %s20, 1
      %p38 = por %p36, %p37
      %p39 = scmp.ne.s32.totalorder %s28, %s29
      %p40 = scmp.eq.s32.totalorder %s20, 0
      %p41 = por %p39, %p40
      %p42 = scmp.ne.s32.totalorder %s28, %s29
      %p43 = scmp.eq.s32.totalorder %s21, 1
      %p44 = por %p42, %p43
      %p46 = scmp.ne.s32.totalorder %s29, %s45
      %p47 = scmp.eq.s32.totalorder %s21, 0
      %p48 = por %p46, %p47
      %s50 = sadd.s32 %s49, 1
      %p53 = scmp.eq.s32.totalorder %s15, 1
      %p54 = scmp.ne.s32.totalorder %s49, %s51
      %p55 = scmp.eq.s32.totalorder %s15, 0
      %p56 = por %p54, %p55
      %p57 = scmp.ne.s32.totalorder %s49, %s51
      %p58 = scmp.eq.s32.totalorder %s20, 1
      %p59 = por %p57, %p58
      %p60 = scmp.ne.s32.totalorder %s51, %s52
      %p61 = scmp.eq.s32.totalorder %s20, 0
      %p62 = por %p60, %p61
      %p63 = scmp.ne.s32.totalorder %s51, %s52
      %p64 = scmp.eq.s32.totalorder %s21, 1
      %p65 = por %p63, %p64
      %p67 = scmp.ne.s32.totalorder %s52, %s66
      %p68 = scmp.eq.s32.totalorder %s21, 0
      %p69 = por %p67, %p68
      %s71 = sadd.s32 %s70, 1
      %p74 = scmp.eq.s32.totalorder %s15, 1
      %p75 = scmp.ne.s32.totalorder %s70, %s72
      %p76 = scmp.eq.s32.totalorder %s15, 0
      %p77 = por %p75, %p76
      %p78 = scmp.ne.s32.totalorder %s70, %s72
      %p79 = scmp.eq.s32.totalorder %s20, 1
      %p80 = por %p78, %p79
      %p81 = scmp.ne.s32.totalorder %s72, %s73
      %p82 = scmp.eq.s32.totalorder %s20, 0
      %p83 = por %p81, %p82
      %p84 = scmp.ne.s32.totalorder %s72, %s73
      %p85 = scmp.eq.s32.totalorder %s21, 1
      %p86 = por %p84, %p85
      %p88 = scmp.ne.s32.totalorder %s73, %s87
      %p89 = scmp.eq.s32.totalorder %s21, 0
      %p90 = por %p88, %p89
      %s91 = ssub.s32 %s15, %s22
      %p92 = scmp.eq.s32.totalorder %s91, 0
      %s94 = sadd.s32 %s93, 1
      %s95 = scalar_select %p92, %s93, %s94
      %p98 = pneg %p92
      %p99 = scmp.eq.s32.totalorder %s15, 1
      %p100 = por %p98, %p99
      %p101 = scmp.ne.s32.totalorder %s93, %s96
      %p102 = scmp.eq.s32.totalorder %s15, 0
      %p103 = por %p101, %p102
      %p104 = scmp.ne.s32.totalorder %s93, %s96
      %p105 = scmp.eq.s32.totalorder %s20, 1
      %p106 = por %p104, %p105
      %p107 = scmp.ne.s32.totalorder %s96, %s97
      %p108 = scmp.eq.s32.totalorder %s20, 0
      %p109 = por %p107, %p108
      %p110 = scmp.ne.s32.totalorder %s96, %s97
      %p111 = scmp.eq.s32.totalorder %s21, 1
      %p112 = por %p110, %p111
      %p114 = scmp.ne.s32.totalorder %s97, %s113
      %p115 = scmp.eq.s32.totalorder %s21, 0
      %p116 = por %p114, %p115
      %p117 = scmp.le.s32.totalorder 1, %s15
      %p118 = scmp.lt.s32.totalorder %s15, 3
      %p119 = pnand %p117, %p118
      %p120 = pneg %p119
      // Predicated region
      $region9: #{tpu_custom_call.1} parent=5 // pred_check
        _
      $region10: #{tpu_custom_call.1} parent=5 // pred_check_branch
        %122 = sbr.rel (%p119) target = $region12
      $region11: #{tpu_custom_call.1} parent=5 // pred_region
        %s123 = ssub.s32 %s15, 1
        // Predicated region
        $region13: #{tpu_custom_call.1} parent=11 // pred_check
          %p124 = pneg %p62
        $region14: #{tpu_custom_call.1} parent=11 // pred_check_branch
          %126 = sbr.rel (%p124) target = $region16
        $region15: #{tpu_custom_call.1} parent=11 // pred_region
          _
        $region16: #{tpu_custom_call.1} parent=11 // pred_fallthru
          _
        // Predicated region
        $region17: #{tpu_custom_call.1} parent=11 // pred_check
          %p127 = pneg %p83
        $region18: #{tpu_custom_call.1} parent=11 // pred_check_branch
          %129 = sbr.rel (%p127) target = $region20
        $region19: #{tpu_custom_call.1} parent=11 // pred_region
          _
        $region20: #{tpu_custom_call.1} parent=11 // pred_fallthru
          _
      $region12: #{tpu_custom_call.1} parent=5 // pred_fallthru
        _
      %p130 = scmp.lt.s32.totalorder %s15, 2
      // Predicated region
      $region21: #{tpu_custom_call.1} parent=5 // pred_check
        %p131 = pneg %p130
      $region22: #{tpu_custom_call.1} parent=5 // pred_check_branch
        %133 = sbr.rel (%p131) target = $region24
      $region23: #{tpu_custom_call.1} parent=5 // pred_region
        // Predicated region
        $region25: #{tpu_custom_call.1} parent=23 // pred_check
          %p134 = pneg %p35
        $region26: #{tpu_custom_call.1} parent=23 // pred_check_branch
          %136 = sbr.rel (%p134) target = $region28
        $region27: #{tpu_custom_call.1} parent=23 // pred_region
          %s137 = sand.u32 %s25, 1
          %s138 = scalar_lea.sflag [#allocation3], %s137
          %s139 = sand.u32 %s25, 1
          %s140 = smul.addr %s139, 16
          %s141 = scalar_lea.vmem [#allocation2], %s140
          %s143 = ssub.s32 256, 256
          %144 = vsyncadd %s138, %s143
          %s145 = smul.addr %s15, 4
          %s146 = smul.addr %s145, 64
          %s147 = scalar_lea.hbm %s0, %s146
          %s149 = sshll.u32 %s141, 4
          %s150 = int_to_ptr.vmem [resolvable:$true] %s149
          %152 = dma.hbm_to_vmem [thread:$0]  %s147, 256, %s150, %s138
        $region28: #{tpu_custom_call.1} parent=23 // pred_fallthru
          _
      $region24: #{tpu_custom_call.1} parent=5 // pred_fallthru
        _
      %p153 = scmp.le.s32.totalorder 1, %s15
      %p154 = scmp.lt.s32.totalorder %s15, 3
      %p155 = pnand %p153, %p154
      %p156 = pneg %p155
      // Predicated region
      $region29: #{tpu_custom_call.1} parent=5 // pred_check
        _
      $region30: #{tpu_custom_call.1} parent=5 // pred_check_branch
        %158 = sbr.rel (%p155) target = $region32
      $region31: #{tpu_custom_call.1} parent=5 // pred_region
        %s159 = ssub.s32 %s15, 1
        %s160 = sand.u32 %s28, 1
        %s161 = scalar_lea.sflag [#allocation3], %s160
        %s162 = sand.u32 %s28, 1
        %s163 = smul.addr %s162, 16
        %s164 = scalar_lea.vmem [#allocation2], %s163
        // Predicated region
        $region33: #{tpu_custom_call.1} parent=31 // pred_check
          %p165 = pneg %p41
        $region34: #{tpu_custom_call.1} parent=31 // pred_check_branch
          %167 = sbr.rel (%p165) target = $region36
        $region35: #{tpu_custom_call.1} parent=31 // pred_region
          %168 = dma.done %s161, 256
        $region36: #{tpu_custom_call.1} parent=31 // pred_fallthru
          _
        %s169 = sand.u32 %s28, 1
        %s170 = scalar_lea.sflag [#allocation3], %s169
        %s171 = sand.u32 %s28, 1
        %s172 = smul.addr %s171, 16
        %s173 = scalar_lea.vmem [#allocation2], %s172
        %p174 = pneg %p41
        %p175 = pneg %p38
        %p176 = pneg %p62
        %p177 = pneg %p59
        %p178 = pneg %p83
        %p179 = pneg %p80
        %p180 = pneg %p109
        %p181 = pneg %p106
        %s182 = sand.u32 %s96, 1
        %s183 = scalar_lea.sflag [#allocation4], %s182
        %s184 = sand.u32 %s96, 1
        %s185 = smul.addr %s184, 24
        %s186 = scalar_lea.vmem [#allocation5], %s185
        %v187 = vld [vmem:[%s1] sm:$0xff]
        %v188 = vmul.f32 %v187, 0.16666667
        %v189 = vld [vmem:[%s2] sm:$0xff]
        %v190 = vld [vmem:[%s164] ss:$4 sm:$0xf]
        %v192 = vlaneseq
        %v193 = vshrl.u32 %v192, 7
        %v194 = vsub.s32 0, %v193
        %v195 = vrot.slane %v190, %v194
        %v196 = vlaneseq
        %v197 = vshrl.u32 %v196, 7
        %v198 = vsub.s32 1, %v197
        %v199 = vrot.slane %v190, %v198
        %v200 = vlaneseq
        %v201 = vshrl.u32 %v200, 7
        %v202 = vsub.s32 2, %v201
        %v203 = vrot.slane %v190, %v202
        %208 = vset.pattern.permute.xlu0 0
        %209 = vperm.xlu0 %208, %v188
        %v210 = vpop.permute.xlu0 %209
        %v212 = vmul.f32 %v210, %v195
        %v213 = vmul.f32 %v210, %v199
        %v214 = vmul.f32 %v210, %v203
        %v215 = vadd.f32 %v212, 0.0
        %v216 = vadd.f32 %v213, 0.0
        %v217 = vadd.f32 %v214, 0.0
        %v218 = vlaneseq
        %v219 = vshrl.u32 %v218, 7
        %v220 = vsub.s32 3, %v219
        %v221 = vrot.slane %v190, %v220
        %223 = vset.pattern.permute.xlu0 1
        %224 = vperm.xlu0 %223, %v188
        %v225 = vpop.permute.xlu0 %224
        %v227 = vmul.f32 %v225, %v195
        %v228 = vmul.f32 %v225, %v199
        %v229 = vmul.f32 %v225, %v203
        %v230 = vmul.f32 %v225, %v221
        %235 = vrot.lane.b32.xlu0 %v227, 127
        %v236 = vpop.permute.xlu0 %235
        %237 = vrot.lane.b32.xlu0 %v228, 127
        %v238 = vpop.permute.xlu0 %237
        %239 = vrot.lane.b32.xlu0 %v229, 127
        %v240 = vpop.permute.xlu0 %239
        %241 = vrot.lane.b32.xlu0 %v230, 127
        %v242 = vpop.permute.xlu0 %241
        %vm243 = vcmask 1039360
        %v244 = vsel %vm243, %v236, %v238
        %v245 = vsel %vm243, %v238, %v240
        %v246 = vsel %vm243, %v240, %v242
        %v250 = vadd.f32 %v215, %v244
        %v251 = vadd.f32 %v216, %v245
        %v252 = vadd.f32 %v217, %v246
        %253 = vset.pattern.permute.xlu0 2
        %254 = vperm.xlu0 %253, %v188
        %v255 = vpop.permute.xlu0 %254
        %v257 = vmul.f32 %v255, %v195
        %v258 = vmul.f32 %v255, %v199
        %v259 = vmul.f32 %v255, %v203
        %v260 = vmul.f32 %v255, %v221
        %265 = vrot.lane.b32.xlu0 %v257, 126
        %v266 = vpop.permute.xlu0 %265
        %267 = vrot.lane.b32.xlu0 %v258, 126
        %v268 = vpop.permute.xlu0 %267
        %269 = vrot.lane.b32.xlu0 %v259, 126
        %v270 = vpop.permute.xlu0 %269
        %271 = vrot.lane.b32.xlu0 %v260, 126
        %v272 = vpop.permute.xlu0 %271
        %vm273 = vcmask 1031168
        %v274 = vsel %vm273, %v266, %v268
        %v275 = vsel %vm273, %v268, %v270
        %v276 = vsel %vm273, %v270, %v272
        %v280 = vadd.f32 %v250, %v274
        %v281 = vadd.f32 %v251, %v275
        %v282 = vadd.f32 %v252, %v276
        %283 = vset.pattern.permute.xlu0 3
        %284 = vperm.xlu0 %283, %v188
        %v285 = vpop.permute.xlu0 %284
        %v287 = vmul.f32 %v285, %v195
        %v288 = vmul.f32 %v285, %v199
        %v289 = vmul.f32 %v285, %v203
        %v290 = vmul.f32 %v285, %v221
        %295 = vrot.lane.b32.xlu0 %v287, 110
        %v296 = vpop.permute.xlu0 %295
        %297 = vrot.lane.b32.xlu0 %v288, 110
        %v298 = vpop.permute.xlu0 %297
        %299 = vrot.lane.b32.xlu0 %v289, 110
        %v300 = vpop.permute.xlu0 %299
        %301 = vrot.lane.b32.xlu0 %v290, 110
        %v302 = vpop.permute.xlu0 %301
        %vm303 = vcmask 900096
        %v304 = vsel %vm303, %v296, %v298
        %v305 = vsel %vm303, %v298, %v300
        %v306 = vsel %vm303, %v300, %v302
        %v310 = vadd.f32 %v280, %v304
        %v311 = vadd.f32 %v281, %v305
        %v312 = vadd.f32 %v282, %v306
        %313 = vset.pattern.permute.xlu0 4
        %314 = vperm.xlu0 %313, %v188
        %v315 = vpop.permute.xlu0 %314
        %v317 = vmul.f32 %v315, %v195
        %v318 = vmul.f32 %v315, %v199
        %v319 = vmul.f32 %v315, %v203
        %v320 = vmul.f32 %v315, %v221
        %325 = vrot.lane.b32.xlu0 %v317, 109
        %v326 = vpop.permute.xlu0 %325
        %327 = vrot.lane.b32.xlu0 %v318, 109
        %v328 = vpop.permute.xlu0 %327
        %329 = vrot.lane.b32.xlu0 %v319, 109
        %v330 = vpop.permute.xlu0 %329
        %331 = vrot.lane.b32.xlu0 %v320, 109
        %v332 = vpop.permute.xlu0 %331
        %vm333 = vcmask 891904
        %v334 = vsel %vm333, %v326, %v328
        %v335 = vsel %vm333, %v328, %v330
        %v336 = vsel %vm333, %v330, %v332
        %v340 = vadd.f32 %v310, %v334
        %v341 = vadd.f32 %v311, %v335
        %v342 = vadd.f32 %v312, %v336
        %343 = vset.pattern.permute.xlu0 5
        %344 = vperm.xlu0 %343, %v188
        %v345 = vpop.permute.xlu0 %344
        %v347 = vmul.f32 %v345, %v195
        %v348 = vmul.f32 %v345, %v199
        %v349 = vmul.f32 %v345, %v203
        %v350 = vmul.f32 %v345, %v221
        %355 = vrot.lane.b32.xlu0 %v347, 108
        %v356 = vpop.permute.xlu0 %355
        %357 = vrot.lane.b32.xlu0 %v348, 108
        %v358 = vpop.permute.xlu0 %357
        %359 = vrot.lane.b32.xlu0 %v349, 108
        %v360 = vpop.permute.xlu0 %359
        %361 = vrot.lane.b32.xlu0 %v350, 108
        %v362 = vpop.permute.xlu0 %361
        %vm363 = vcmask 883712
        %v364 = vsel %vm363, %v356, %v358
        %v365 = vsel %vm363, %v358, %v360
        %v366 = vsel %vm363, %v360, %v362
        %v370 = vadd.f32 %v340, %v364
        %v371 = vadd.f32 %v341, %v365
        %v372 = vadd.f32 %v342, %v366
        %373 = vset.pattern.permute.xlu0 6
        %374 = vperm.xlu0 %373, %v188
        %v375 = vpop.permute.xlu0 %374
        %v377 = vmul.f32 %v375, %v195
        %v378 = vmul.f32 %v375, %v199
        %v379 = vmul.f32 %v375, %v203
        %v380 = vmul.f32 %v375, %v221
        %385 = vrot.lane.b32.xlu0 %v377, 92
        %v386 = vpop.permute.xlu0 %385
        %387 = vrot.lane.b32.xlu0 %v378, 92
        %v388 = vpop.permute.xlu0 %387
        %389 = vrot.lane.b32.xlu0 %v379, 92
        %v390 = vpop.permute.xlu0 %389
        %391 = vrot.lane.b32.xlu0 %v380, 92
        %v392 = vpop.permute.xlu0 %391
        %vm393 = vcmask 752640
        %v394 = vsel %vm393, %v386, %v388
        %v395 = vsel %vm393, %v388, %v390
        %v396 = vsel %vm393, %v390, %v392
        %v400 = vadd.f32 %v370, %v394
        %v401 = vadd.f32 %v371, %v395
        %v402 = vadd.f32 %v372, %v396
        %403 = vset.pattern.permute.xlu0 7
        %404 = vperm.xlu0 %403, %v188
        %v405 = vpop.permute.xlu0 %404
        %v407 = vmul.f32 %v405, %v195
        %v408 = vmul.f32 %v405, %v199
        %v409 = vmul.f32 %v405, %v203
        %v410 = vmul.f32 %v405, %v221
        %415 = vrot.lane.b32.xlu0 %v407, 91
        %v416 = vpop.permute.xlu0 %415
        %417 = vrot.lane.b32.xlu0 %v408, 91
        %v418 = vpop.permute.xlu0 %417
        %419 = vrot.lane.b32.xlu0 %v409, 91
        %v420 = vpop.permute.xlu0 %419
        %421 = vrot.lane.b32.xlu0 %v410, 91
        %v422 = vpop.permute.xlu0 %421
        %vm423 = vcmask 744448
        %v424 = vsel %vm423, %v416, %v418
        %v425 = vsel %vm423, %v418, %v420
        %v426 = vsel %vm423, %v420, %v422
        %v430 = vadd.f32 %v400, %v424
        %v431 = vadd.f32 %v401, %v425
        %v432 = vadd.f32 %v402, %v426
        %433 = vset.pattern.permute.xlu0 8
        %434 = vperm.xlu0 %433, %v188
        %v435 = vpop.permute.xlu0 %434
        %v437 = vmul.f32 %v435, %v195
        %v438 = vmul.f32 %v435, %v199
        %v439 = vmul.f32 %v435, %v203
        %v440 = vmul.f32 %v435, %v221
        %445 = vrot.lane.b32.xlu0 %v437, 90
        %v446 = vpop.permute.xlu0 %445
        %447 = vrot.lane.b32.xlu0 %v438, 90
        %v448 = vpop.permute.xlu0 %447
        %449 = vrot.lane.b32.xlu0 %v439, 90
        %v450 = vpop.permute.xlu0 %449
        %451 = vrot.lane.b32.xlu0 %v440, 90
        %v452 = vpop.permute.xlu0 %451
        %vm453 = vcmask 736256
        %v454 = vsel %vm453, %v446, %v448
        %v455 = vsel %vm453, %v448, %v450
        %v456 = vsel %vm453, %v450, %v452
        %v460 = vadd.f32 %v430, %v454
        %v461 = vadd.f32 %v431, %v455
        %v462 = vadd.f32 %v432, %v456
        %s463 = scalar_lea.vmem %s164, 1 [#allocation2]
        %v464 = vld [vmem:[%s463] ss:$4 sm:$0xf]
        %v466 = vlaneseq
        %v467 = vshrl.u32 %v466, 7
        %v468 = vsub.s32 0, %v467
        %v469 = vrot.slane %v464, %v468
        %v470 = vlaneseq
        %v471 = vshrl.u32 %v470, 7
        %v472 = vsub.s32 1, %v471
        %v473 = vrot.slane %v464, %v472
        %v474 = vlaneseq
        %v475 = vshrl.u32 %v474, 7
        %v476 = vsub.s32 2, %v475
        %v477 = vrot.slane %v464, %v476
        %481 = vset.pattern.permute.xlu0 9
        %482 = vperm.xlu0 %481, %v188
        %v483 = vpop.permute.xlu0 %482
        %v485 = vmul.f32 %v483, %v469
        %v486 = vmul.f32 %v483, %v473
        %v487 = vmul.f32 %v483, %v477
        %v488 = vadd.f32 %v460, %v485
        %v489 = vadd.f32 %v461, %v486
        %v490 = vadd.f32 %v462, %v487
        %v491 = vlaneseq
        %v492 = vshrl.u32 %v491, 7
        %v493 = vsub.s32 3, %v492
        %v494 = vrot.slane %v464, %v493
        %496 = vset.pattern.permute.xlu0 10
        %497 = vperm.xlu0 %496, %v188
        %v498 = vpop.permute.xlu0 %497
        %v500 = vmul.f32 %v498, %v469
        %v501 = vmul.f32 %v498, %v473
        %v502 = vmul.f32 %v498, %v477
        %v503 = vmul.f32 %v498, %v494
        %508 = vrot.lane.b32.xlu0 %v500, 127
        %v509 = vpop.permute.xlu0 %508
        %510 = vrot.lane.b32.xlu0 %v501, 127
        %v511 = vpop.permute.xlu0 %510
        %512 = vrot.lane.b32.xlu0 %v502, 127
        %v513 = vpop.permute.xlu0 %512
        %514 = vrot.lane.b32.xlu0 %v503, 127
        %v515 = vpop.permute.xlu0 %514
        %v516 = vsel %vm243, %v509, %v511
        %v517 = vsel %vm243, %v511, %v513
        %v518 = vsel %vm243, %v513, %v515
        %v522 = vadd.f32 %v488, %v516
        %v523 = vadd.f32 %v489, %v517
        %v524 = vadd.f32 %v490, %v518
        %525 = vset.pattern.permute.xlu0 11
        %526 = vperm.xlu0 %525, %v188
        %v527 = vpop.permute.xlu0 %526
        %v529 = vmul.f32 %v527, %v469
        %v530 = vmul.f32 %v527, %v473
        %v531 = vmul.f32 %v527, %v477
        %v532 = vmul.f32 %v527, %v494
        %537 = vrot.lane.b32.xlu0 %v529, 126
        %v538 = vpop.permute.xlu0 %537
        %539 = vrot.lane.b32.xlu0 %v530, 126
        %v540 = vpop.permute.xlu0 %539
        %541 = vrot.lane.b32.xlu0 %v531, 126
        %v542 = vpop.permute.xlu0 %541
        %543 = vrot.lane.b32.xlu0 %v532, 126
        %v544 = vpop.permute.xlu0 %543
        %v545 = vsel %vm273, %v538, %v540
        %v546 = vsel %vm273, %v540, %v542
        %v547 = vsel %vm273, %v542, %v544
        %v551 = vadd.f32 %v522, %v545
        %v552 = vadd.f32 %v523, %v546
        %v553 = vadd.f32 %v524, %v547
        %554 = vset.pattern.permute.xlu0 12
        %555 = vperm.xlu0 %554, %v188
        %v556 = vpop.permute.xlu0 %555
        %v558 = vmul.f32 %v556, %v469
        %v559 = vmul.f32 %v556, %v473
        %v560 = vmul.f32 %v556, %v477
        %v561 = vmul.f32 %v556, %v494
        %566 = vrot.lane.b32.xlu0 %v558, 110
        %v567 = vpop.permute.xlu0 %566
        %568 = vrot.lane.b32.xlu0 %v559, 110
        %v569 = vpop.permute.xlu0 %568
        %570 = vrot.lane.b32.xlu0 %v560, 110
        %v571 = vpop.permute.xlu0 %570
        %572 = vrot.lane.b32.xlu0 %v561, 110
        %v573 = vpop.permute.xlu0 %572
        %v574 = vsel %vm303, %v567, %v569
        %v575 = vsel %vm303, %v569, %v571
        %v576 = vsel %vm303, %v571, %v573
        %v580 = vadd.f32 %v551, %v574
        %v581 = vadd.f32 %v552, %v575
        %v582 = vadd.f32 %v553, %v576
        %583 = vset.pattern.permute.xlu0 13
        %584 = vperm.xlu0 %583, %v188
        %v585 = vpop.permute.xlu0 %584
        %v587 = vmul.f32 %v585, %v469
        %v588 = vmul.f32 %v585, %v473
        %v589 = vmul.f32 %v585, %v477
        %v590 = vmul.f32 %v585, %v494
        %595 = vrot.lane.b32.xlu0 %v587, 109
        %v596 = vpop.permute.xlu0 %595
        %597 = vrot.lane.b32.xlu0 %v588, 109
        %v598 = vpop.permute.xlu0 %597
        %599 = vrot.lane.b32.xlu0 %v589, 109
        %v600 = vpop.permute.xlu0 %599
        %601 = vrot.lane.b32.xlu0 %v590, 109
        %v602 = vpop.permute.xlu0 %601
        %v603 = vsel %vm333, %v596, %v598
        %v604 = vsel %vm333, %v598, %v600
        %v605 = vsel %vm333, %v600, %v602
        %v609 = vadd.f32 %v580, %v603
        %v610 = vadd.f32 %v581, %v604
        %v611 = vadd.f32 %v582, %v605
        %612 = vset.pattern.permute.xlu0 14
        %613 = vperm.xlu0 %612, %v188
        %v614 = vpop.permute.xlu0 %613
        %v616 = vmul.f32 %v614, %v469
        %v617 = vmul.f32 %v614, %v473
        %v618 = vmul.f32 %v614, %v477
        %v619 = vmul.f32 %v614, %v494
        %624 = vrot.lane.b32.xlu0 %v616, 108
        %v625 = vpop.permute.xlu0 %624
        %626 = vrot.lane.b32.xlu0 %v617, 108
        %v627 = vpop.permute.xlu0 %626
        %628 = vrot.lane.b32.xlu0 %v618, 108
        %v629 = vpop.permute.xlu0 %628
        %630 = vrot.lane.b32.xlu0 %v619, 108
        %v631 = vpop.permute.xlu0 %630
        %v632 = vsel %vm363, %v625, %v627
        %v633 = vsel %vm363, %v627, %v629
        %v634 = vsel %vm363, %v629, %v631
        %v638 = vadd.f32 %v609, %v632
        %v639 = vadd.f32 %v610, %v633
        %v640 = vadd.f32 %v611, %v634
        %641 = vset.pattern.permute.xlu0 15
        %642 = vperm.xlu0 %641, %v188
        %v643 = vpop.permute.xlu0 %642
        %v645 = vmul.f32 %v643, %v469
        %v646 = vmul.f32 %v643, %v473
        %v647 = vmul.f32 %v643, %v477
        %v648 = vmul.f32 %v643, %v494
        %653 = vrot.lane.b32.xlu0 %v645, 92
        %v654 = vpop.permute.xlu0 %653
        %655 = vrot.lane.b32.xlu0 %v646, 92
        %v656 = vpop.permute.xlu0 %655
        %657 = vrot.lane.b32.xlu0 %v647, 92
        %v658 = vpop.permute.xlu0 %657
        %659 = vrot.lane.b32.xlu0 %v648, 92
        %v660 = vpop.permute.xlu0 %659
        %v661 = vsel %vm393, %v654, %v656
        %v662 = vsel %vm393, %v656, %v658
        %v663 = vsel %vm393, %v658, %v660
        %v667 = vadd.f32 %v638, %v661
        %v668 = vadd.f32 %v639, %v662
        %v669 = vadd.f32 %v640, %v663
        %670 = vset.pattern.permute.xlu0 16
        %671 = vperm.xlu0 %670, %v188
        %v672 = vpop.permute.xlu0 %671
        %v674 = vmul.f32 %v672, %v469
        %v675 = vmul.f32 %v672, %v473
        %v676 = vmul.f32 %v672, %v477
        %v677 = vmul.f32 %v672, %v494
        %682 = vrot.lane.b32.xlu0 %v674, 91
        %v683 = vpop.permute.xlu0 %682
        %684 = vrot.lane.b32.xlu0 %v675, 91
        %v685 = vpop.permute.xlu0 %684
        %686 = vrot.lane.b32.xlu0 %v676, 91
        %v687 = vpop.permute.xlu0 %686
        %688 = vrot.lane.b32.xlu0 %v677, 91
        %v689 = vpop.permute.xlu0 %688
        %v690 = vsel %vm423, %v683, %v685
        %v691 = vsel %vm423, %v685, %v687
        %v692 = vsel %vm423, %v687, %v689
        %v696 = vadd.f32 %v667, %v690
        %v697 = vadd.f32 %v668, %v691
        %v698 = vadd.f32 %v669, %v692
        %699 = vset.pattern.permute.xlu0 17
        %700 = vperm.xlu0 %699, %v188
        %v701 = vpop.permute.xlu0 %700
        %v703 = vmul.f32 %v701, %v469
        %v704 = vmul.f32 %v701, %v473
        %v705 = vmul.f32 %v701, %v477
        %v706 = vmul.f32 %v701, %v494
        %711 = vrot.lane.b32.xlu0 %v703, 90
        %v712 = vpop.permute.xlu0 %711
        %713 = vrot.lane.b32.xlu0 %v704, 90
        %v714 = vpop.permute.xlu0 %713
        %715 = vrot.lane.b32.xlu0 %v705, 90
        %v716 = vpop.permute.xlu0 %715
        %717 = vrot.lane.b32.xlu0 %v706, 90
        %v718 = vpop.permute.xlu0 %717
        %v719 = vsel %vm453, %v712, %v714
        %v720 = vsel %vm453, %v714, %v716
        %v721 = vsel %vm453, %v716, %v718
        %v725 = vadd.f32 %v696, %v719
        %v726 = vadd.f32 %v697, %v720
        %v727 = vadd.f32 %v698, %v721
        %s728 = scalar_lea.vmem %s164, 2 [#allocation2]
        %v729 = vld [vmem:[%s728] ss:$4 sm:$0xf]
        %v731 = vlaneseq
        %v732 = vshrl.u32 %v731, 7
        %v733 = vsub.s32 0, %v732
        %v734 = vrot.slane %v729, %v733
        %v735 = vlaneseq
        %v736 = vshrl.u32 %v735, 7
        %v737 = vsub.s32 1, %v736
        %v738 = vrot.slane %v729, %v737
        %v739 = vlaneseq
        %v740 = vshrl.u32 %v739, 7
        %v741 = vsub.s32 2, %v740
        %v742 = vrot.slane %v729, %v741
        %746 = vset.pattern.permute.xlu0 18
        %747 = vperm.xlu0 %746, %v188
        %v748 = vpop.permute.xlu0 %747
        %v750 = vmul.f32 %v748, %v734
        %v751 = vmul.f32 %v748, %v738
        %v752 = vmul.f32 %v748, %v742
        %v753 = vadd.f32 %v725, %v750
        %v754 = vadd.f32 %v726, %v751
        %v755 = vadd.f32 %v727, %v752
        %v756 = vlaneseq
        %v757 = vshrl.u32 %v756, 7
        %v758 = vsub.s32 3, %v757
        %v759 = vrot.slane %v729, %v758
        %761 = vset.pattern.permute.xlu0 19
        %762 = vperm.xlu0 %761, %v188
        %v763 = vpop.permute.xlu0 %762
        %v765 = vmul.f32 %v763, %v734
        %v766 = vmul.f32 %v763, %v738
        %v767 = vmul.f32 %v763, %v742
        %v768 = vmul.f32 %v763, %v759
        %773 = vrot.lane.b32.xlu0 %v765, 127
        %v774 = vpop.permute.xlu0 %773
        %775 = vrot.lane.b32.xlu0 %v766, 127
        %v776 = vpop.permute.xlu0 %775
        %777 = vrot.lane.b32.xlu0 %v767, 127
        %v778 = vpop.permute.xlu0 %777
        %779 = vrot.lane.b32.xlu0 %v768, 127
        %v780 = vpop.permute.xlu0 %779
        %v781 = vsel %vm243, %v774, %v776
        %v782 = vsel %vm243, %v776, %v778
        %v783 = vsel %vm243, %v778, %v780
        %v787 = vadd.f32 %v753, %v781
        %v788 = vadd.f32 %v754, %v782
        %v789 = vadd.f32 %v755, %v783
        %790 = vset.pattern.permute.xlu0 20
        %791 = vperm.xlu0 %790, %v188
        %v792 = vpop.permute.xlu0 %791
        %v794 = vmul.f32 %v792, %v734
        %v795 = vmul.f32 %v792, %v738
        %v796 = vmul.f32 %v792, %v742
        %v797 = vmul.f32 %v792, %v759
        %802 = vrot.lane.b32.xlu0 %v794, 126
        %v803 = vpop.permute.xlu0 %802
        %804 = vrot.lane.b32.xlu0 %v795, 126
        %v805 = vpop.permute.xlu0 %804
        %806 = vrot.lane.b32.xlu0 %v796, 126
        %v807 = vpop.permute.xlu0 %806
        %808 = vrot.lane.b32.xlu0 %v797, 126
        %v809 = vpop.permute.xlu0 %808
        %v810 = vsel %vm273, %v803, %v805
        %v811 = vsel %vm273, %v805, %v807
        %v812 = vsel %vm273, %v807, %v809
        %v816 = vadd.f32 %v787, %v810
        %v817 = vadd.f32 %v788, %v811
        %v818 = vadd.f32 %v789, %v812
        %819 = vset.pattern.permute.xlu0 21
        %820 = vperm.xlu0 %819, %v188
        %v821 = vpop.permute.xlu0 %820
        %v823 = vmul.f32 %v821, %v734
        %v824 = vmul.f32 %v821, %v738
        %v825 = vmul.f32 %v821, %v742
        %v826 = vmul.f32 %v821, %v759
        %831 = vrot.lane.b32.xlu0 %v823, 110
        %v832 = vpop.permute.xlu0 %831
        %833 = vrot.lane.b32.xlu0 %v824, 110
        %v834 = vpop.permute.xlu0 %833
        %835 = vrot.lane.b32.xlu0 %v825, 110
        %v836 = vpop.permute.xlu0 %835
        %837 = vrot.lane.b32.xlu0 %v826, 110
        %v838 = vpop.permute.xlu0 %837
        %v839 = vsel %vm303, %v832, %v834
        %v840 = vsel %vm303, %v834, %v836
        %v841 = vsel %vm303, %v836, %v838
        %v845 = vadd.f32 %v816, %v839
        %v846 = vadd.f32 %v817, %v840
        %v847 = vadd.f32 %v818, %v841
        %848 = vset.pattern.permute.xlu0 22
        %849 = vperm.xlu0 %848, %v188
        %v850 = vpop.permute.xlu0 %849
        %v852 = vmul.f32 %v850, %v734
        %v853 = vmul.f32 %v850, %v738
        %v854 = vmul.f32 %v850, %v742
        %v855 = vmul.f32 %v850, %v759
        %860 = vrot.lane.b32.xlu0 %v852, 109
        %v861 = vpop.permute.xlu0 %860
        %862 = vrot.lane.b32.xlu0 %v853, 109
        %v863 = vpop.permute.xlu0 %862
        %864 = vrot.lane.b32.xlu0 %v854, 109
        %v865 = vpop.permute.xlu0 %864
        %866 = vrot.lane.b32.xlu0 %v855, 109
        %v867 = vpop.permute.xlu0 %866
        %v868 = vsel %vm333, %v861, %v863
        %v869 = vsel %vm333, %v863, %v865
        %v870 = vsel %vm333, %v865, %v867
        %v874 = vadd.f32 %v845, %v868
        %v875 = vadd.f32 %v846, %v869
        %v876 = vadd.f32 %v847, %v870
        %877 = vset.pattern.permute.xlu0 23
        %878 = vperm.xlu0 %877, %v188
        %v879 = vpop.permute.xlu0 %878
        %v881 = vmul.f32 %v879, %v734
        %v882 = vmul.f32 %v879, %v738
        %v883 = vmul.f32 %v879, %v742
        %v884 = vmul.f32 %v879, %v759
        %889 = vrot.lane.b32.xlu0 %v881, 108
        %v890 = vpop.permute.xlu0 %889
        %891 = vrot.lane.b32.xlu0 %v882, 108
        %v892 = vpop.permute.xlu0 %891
        %893 = vrot.lane.b32.xlu0 %v883, 108
        %v894 = vpop.permute.xlu0 %893
        %895 = vrot.lane.b32.xlu0 %v884, 108
        %v896 = vpop.permute.xlu0 %895
        %v897 = vsel %vm363, %v890, %v892
        %v898 = vsel %vm363, %v892, %v894
        %v899 = vsel %vm363, %v894, %v896
        %v903 = vadd.f32 %v874, %v897
        %v904 = vadd.f32 %v875, %v898
        %v905 = vadd.f32 %v876, %v899
        %906 = vset.pattern.permute.xlu0 24
        %907 = vperm.xlu0 %906, %v188
        %v908 = vpop.permute.xlu0 %907
        %v910 = vmul.f32 %v908, %v734
        %v911 = vmul.f32 %v908, %v738
        %v912 = vmul.f32 %v908, %v742
        %v913 = vmul.f32 %v908, %v759
        %918 = vrot.lane.b32.xlu0 %v910, 92
        %v919 = vpop.permute.xlu0 %918
        %920 = vrot.lane.b32.xlu0 %v911, 92
        %v921 = vpop.permute.xlu0 %920
        %922 = vrot.lane.b32.xlu0 %v912, 92
        %v923 = vpop.permute.xlu0 %922
        %924 = vrot.lane.b32.xlu0 %v913, 92
        %v925 = vpop.permute.xlu0 %924
        %v926 = vsel %vm393, %v919, %v921
        %v927 = vsel %vm393, %v921, %v923
        %v928 = vsel %vm393, %v923, %v925
        %v932 = vadd.f32 %v903, %v926
        %v933 = vadd.f32 %v904, %v927
        %v934 = vadd.f32 %v905, %v928
        %935 = vset.pattern.permute.xlu0 25
        %936 = vperm.xlu0 %935, %v188
        %v937 = vpop.permute.xlu0 %936
        %v939 = vmul.f32 %v937, %v734
        %v940 = vmul.f32 %v937, %v738
        %v941 = vmul.f32 %v937, %v742
        %v942 = vmul.f32 %v937, %v759
        %947 = vrot.lane.b32.xlu0 %v939, 91
        %v948 = vpop.permute.xlu0 %947
        %949 = vrot.lane.b32.xlu0 %v940, 91
        %v950 = vpop.permute.xlu0 %949
        %951 = vrot.lane.b32.xlu0 %v941, 91
        %v952 = vpop.permute.xlu0 %951
        %953 = vrot.lane.b32.xlu0 %v942, 91
        %v954 = vpop.permute.xlu0 %953
        %v955 = vsel %vm423, %v948, %v950
        %v956 = vsel %vm423, %v950, %v952
        %v957 = vsel %vm423, %v952, %v954
        %v961 = vadd.f32 %v932, %v955
        %v962 = vadd.f32 %v933, %v956
        %v963 = vadd.f32 %v934, %v957
        %964 = vset.pattern.permute.xlu0 26
        %965 = vperm.xlu0 %964, %v188
        %v966 = vpop.permute.xlu0 %965
        %v968 = vmul.f32 %v966, %v734
        %v969 = vmul.f32 %v966, %v738
        %v970 = vmul.f32 %v966, %v742
        %v971 = vmul.f32 %v966, %v759
        %976 = vrot.lane.b32.xlu0 %v968, 90
        %v977 = vpop.permute.xlu0 %976
        %978 = vrot.lane.b32.xlu0 %v969, 90
        %v979 = vpop.permute.xlu0 %978
        %980 = vrot.lane.b32.xlu0 %v970, 90
        %v981 = vpop.permute.xlu0 %980
        %982 = vrot.lane.b32.xlu0 %v971, 90
        %v983 = vpop.permute.xlu0 %982
        %v984 = vsel %vm453, %v977, %v979
        %v985 = vsel %vm453, %v979, %v981
        %v986 = vsel %vm453, %v981, %v983
        %v990 = vadd.f32 %v961, %v984
        %v991 = vadd.f32 %v962, %v985
        %v992 = vadd.f32 %v963, %v986
        %s993 = scalar_lea.vmem %s164, 3 [#allocation2]
        %v994 = vld [vmem:[%s993] ss:$4 sm:$0xf]
        %v996 = vlaneseq
        %v997 = vshrl.u32 %v996, 7
        %v998 = vsub.s32 0, %v997
        %v999 = vrot.slane %v994, %v998
        %v1000 = vlaneseq
        %v1001 = vshrl.u32 %v1000, 7
        %v1002 = vsub.s32 1, %v1001
        %v1003 = vrot.slane %v994, %v1002
        %v1004 = vlaneseq
        %v1005 = vshrl.u32 %v1004, 7
        %v1006 = vsub.s32 2, %v1005
        %v1007 = vrot.slane %v994, %v1006
        %1011 = vset.pattern.permute.xlu0 27
        %1012 = vperm.xlu0 %1011, %v188
        %v1013 = vpop.permute.xlu0 %1012
        %v1015 = vmul.f32 %v1013, %v999
        %v1016 = vmul.f32 %v1013, %v1003
        %v1017 = vmul.f32 %v1013, %v1007
        %v1018 = vadd.f32 %v990, %v1015
        %v1019 = vadd.f32 %v991, %v1016
        %v1020 = vadd.f32 %v992, %v1017
        %v1021 = vlaneseq
        %v1022 = vshrl.u32 %v1021, 7
        %v1023 = vsub.s32 3, %v1022
        %v1024 = vrot.slane %v994, %v1023
        %1026 = vset.pattern.permute.xlu0 28
        %1027 = vperm.xlu0 %1026, %v188
        %v1028 = vpop.permute.xlu0 %1027
        %v1030 = vmul.f32 %v1028, %v999
        %v1031 = vmul.f32 %v1028, %v1003
        %v1032 = vmul.f32 %v1028, %v1007
        %v1033 = vmul.f32 %v1028, %v1024
        %1038 = vrot.lane.b32.xlu0 %v1030, 127
        %v1039 = vpop.permute.xlu0 %1038
        %1040 = vrot.lane.b32.xlu0 %v1031, 127
        %v1041 = vpop.permute.xlu0 %1040
        %1042 = vrot.lane.b32.xlu0 %v1032, 127
        %v1043 = vpop.permute.xlu0 %1042
        %1044 = vrot.lane.b32.xlu0 %v1033, 127
        %v1045 = vpop.permute.xlu0 %1044
        %v1046 = vsel %vm243, %v1039, %v1041
        %v1047 = vsel %vm243, %v1041, %v1043
        %v1048 = vsel %vm243, %v1043, %v1045
        %v1052 = vadd.f32 %v1018, %v1046
        %v1053 = vadd.f32 %v1019, %v1047
        %v1054 = vadd.f32 %v1020, %v1048
        %1055 = vset.pattern.permute.xlu0 29
        %1056 = vperm.xlu0 %1055, %v188
        %v1057 = vpop.permute.xlu0 %1056
        %v1059 = vmul.f32 %v1057, %v999
        %v1060 = vmul.f32 %v1057, %v1003
        %v1061 = vmul.f32 %v1057, %v1007
        %v1062 = vmul.f32 %v1057, %v1024
        %1067 = vrot.lane.b32.xlu0 %v1059, 126
        %v1068 = vpop.permute.xlu0 %1067
        %1069 = vrot.lane.b32.xlu0 %v1060, 126
        %v1070 = vpop.permute.xlu0 %1069
        %1071 = vrot.lane.b32.xlu0 %v1061, 126
        %v1072 = vpop.permute.xlu0 %1071
        %1073 = vrot.lane.b32.xlu0 %v1062, 126
        %v1074 = vpop.permute.xlu0 %1073
        %v1075 = vsel %vm273, %v1068, %v1070
        %v1076 = vsel %vm273, %v1070, %v1072
        %v1077 = vsel %vm273, %v1072, %v1074
        %v1081 = vadd.f32 %v1052, %v1075
        %v1082 = vadd.f32 %v1053, %v1076
        %v1083 = vadd.f32 %v1054, %v1077
        %1084 = vset.pattern.permute.xlu0 30
        %1085 = vperm.xlu0 %1084, %v188
        %v1086 = vpop.permute.xlu0 %1085
        %v1088 = vmul.f32 %v1086, %v999
        %v1089 = vmul.f32 %v1086, %v1003
        %v1090 = vmul.f32 %v1086, %v1007
        %v1091 = vmul.f32 %v1086, %v1024
        %1096 = vrot.lane.b32.xlu0 %v1088, 110
        %v1097 = vpop.permute.xlu0 %1096
        %1098 = vrot.lane.b32.xlu0 %v1089, 110
        %v1099 = vpop.permute.xlu0 %1098
        %1100 = vrot.lane.b32.xlu0 %v1090, 110
        %v1101 = vpop.permute.xlu0 %1100
        %1102 = vrot.lane.b32.xlu0 %v1091, 110
        %v1103 = vpop.permute.xlu0 %1102
        %v1104 = vsel %vm303, %v1097, %v1099
        %v1105 = vsel %vm303, %v1099, %v1101
        %v1106 = vsel %vm303, %v1101, %v1103
        %v1110 = vadd.f32 %v1081, %v1104
        %v1111 = vadd.f32 %v1082, %v1105
        %v1112 = vadd.f32 %v1083, %v1106
        %1113 = vset.pattern.permute.xlu0 31
        %1114 = vperm.xlu0 %1113, %v188
        %v1115 = vpop.permute.xlu0 %1114
        %v1117 = vmul.f32 %v1115, %v999
        %v1118 = vmul.f32 %v1115, %v1003
        %v1119 = vmul.f32 %v1115, %v1007
        %v1120 = vmul.f32 %v1115, %v1024
        %1125 = vrot.lane.b32.xlu0 %v1117, 109
        %v1126 = vpop.permute.xlu0 %1125
        %1127 = vrot.lane.b32.xlu0 %v1118, 109
        %v1128 = vpop.permute.xlu0 %1127
        %1129 = vrot.lane.b32.xlu0 %v1119, 109
        %v1130 = vpop.permute.xlu0 %1129
        %1131 = vrot.lane.b32.xlu0 %v1120, 109
        %v1132 = vpop.permute.xlu0 %1131
        %v1133 = vsel %vm333, %v1126, %v1128
        %v1134 = vsel %vm333, %v1128, %v1130
        %v1135 = vsel %vm333, %v1130, %v1132
        %v1139 = vadd.f32 %v1110, %v1133
        %v1140 = vadd.f32 %v1111, %v1134
        %v1141 = vadd.f32 %v1112, %v1135
        %1142 = vset.pattern.permute.xlu0 32
        %1143 = vperm.xlu0 %1142, %v188
        %v1144 = vpop.permute.xlu0 %1143
        %v1146 = vmul.f32 %v1144, %v999
        %v1147 = vmul.f32 %v1144, %v1003
        %v1148 = vmul.f32 %v1144, %v1007
        %v1149 = vmul.f32 %v1144, %v1024
        %1154 = vrot.lane.b32.xlu0 %v1146, 108
        %v1155 = vpop.permute.xlu0 %1154
        %1156 = vrot.lane.b32.xlu0 %v1147, 108
        %v1157 = vpop.permute.xlu0 %1156
        %1158 = vrot.lane.b32.xlu0 %v1148, 108
        %v1159 = vpop.permute.xlu0 %1158
        %1160 = vrot.lane.b32.xlu0 %v1149, 108
        %v1161 = vpop.permute.xlu0 %1160
        %v1162 = vsel %vm363, %v1155, %v1157
        %v1163 = vsel %vm363, %v1157, %v1159
        %v1164 = vsel %vm363, %v1159, %v1161
        %v1168 = vadd.f32 %v1139, %v1162
        %v1169 = vadd.f32 %v1140, %v1163
        %v1170 = vadd.f32 %v1141, %v1164
        %1171 = vset.pattern.permute.xlu0 33
        %1172 = vperm.xlu0 %1171, %v188
        %v1173 = vpop.permute.xlu0 %1172
        %v1175 = vmul.f32 %v1173, %v999
        %v1176 = vmul.f32 %v1173, %v1003
        %v1177 = vmul.f32 %v1173, %v1007
        %v1178 = vmul.f32 %v1173, %v1024
        %1183 = vrot.lane.b32.xlu0 %v1175, 92
        %v1184 = vpop.permute.xlu0 %1183
        %1185 = vrot.lane.b32.xlu0 %v1176, 92
        %v1186 = vpop.permute.xlu0 %1185
        %1187 = vrot.lane.b32.xlu0 %v1177, 92
        %v1188 = vpop.permute.xlu0 %1187
        %1189 = vrot.lane.b32.xlu0 %v1178, 92
        %v1190 = vpop.permute.xlu0 %1189
        %v1191 = vsel %vm393, %v1184, %v1186
        %v1192 = vsel %vm393, %v1186, %v1188
        %v1193 = vsel %vm393, %v1188, %v1190
        %v1197 = vadd.f32 %v1168, %v1191
        %v1198 = vadd.f32 %v1169, %v1192
        %v1199 = vadd.f32 %v1170, %v1193
        %1200 = vset.pattern.permute.xlu0 34
        %1201 = vperm.xlu0 %1200, %v188
        %v1202 = vpop.permute.xlu0 %1201
        %v1204 = vmul.f32 %v1202, %v999
        %v1205 = vmul.f32 %v1202, %v1003
        %v1206 = vmul.f32 %v1202, %v1007
        %v1207 = vmul.f32 %v1202, %v1024
        %1212 = vrot.lane.b32.xlu0 %v1204, 91
        %v1213 = vpop.permute.xlu0 %1212
        %1214 = vrot.lane.b32.xlu0 %v1205, 91
        %v1215 = vpop.permute.xlu0 %1214
        %1216 = vrot.lane.b32.xlu0 %v1206, 91
        %v1217 = vpop.permute.xlu0 %1216
        %1218 = vrot.lane.b32.xlu0 %v1207, 91
        %v1219 = vpop.permute.xlu0 %1218
        %v1220 = vsel %vm423, %v1213, %v1215
        %v1221 = vsel %vm423, %v1215, %v1217
        %v1222 = vsel %vm423, %v1217, %v1219
        %v1226 = vadd.f32 %v1197, %v1220
        %v1227 = vadd.f32 %v1198, %v1221
        %v1228 = vadd.f32 %v1199, %v1222
        %1229 = vset.pattern.permute.xlu0 35
        %1230 = vperm.xlu0 %1229, %v188
        %v1231 = vpop.permute.xlu0 %1230
        %v1233 = vmul.f32 %v1231, %v999
        %v1234 = vmul.f32 %v1231, %v1003
        %v1235 = vmul.f32 %v1231, %v1007
        %v1236 = vmul.f32 %v1231, %v1024
        %1241 = vrot.lane.b32.xlu0 %v1233, 90
        %v1242 = vpop.permute.xlu0 %1241
        %1243 = vrot.lane.b32.xlu0 %v1234, 90
        %v1244 = vpop.permute.xlu0 %1243
        %1245 = vrot.lane.b32.xlu0 %v1235, 90
        %v1246 = vpop.permute.xlu0 %1245
        %1247 = vrot.lane.b32.xlu0 %v1236, 90
        %v1248 = vpop.permute.xlu0 %1247
        %v1249 = vsel %vm453, %v1242, %v1244
        %v1250 = vsel %vm453, %v1244, %v1246
        %v1251 = vsel %vm453, %v1246, %v1248
        %v1255 = vadd.f32 %v1226, %v1249
        %v1256 = vadd.f32 %v1227, %v1250
        %v1257 = vadd.f32 %v1228, %v1251
        %1259 = vset.pattern.permute.xlu0 0
        %1260 = vperm.xlu0 %1259, %v189
        %v1261 = vpop.permute.xlu0 %1260
        %v1263 = vadd.f32 %v1255, %v1261
        %v1264 = vadd.f32 %v1256, %v1261
        %v1265 = vadd.f32 %v1257, %v1261
        %1266 = vst [vmem:[%s186] sm:$0xff] %v1263
        %1267 = vst [vmem:[%s186 + $0x8] sm:$0xff] %v1264
        %1268 = vst [vmem:[%s186 + $0x10] sm:$0xff] %v1265
        %s1269 = sand.u32 %s96, 1
        %s1270 = scalar_lea.sflag [#allocation4], %s1269
        %s1271 = sand.u32 %s96, 1
        %s1272 = smul.addr %s1271, 24
        %s1273 = scalar_lea.vmem [#allocation5], %s1272
        // Predicated region
        $region37: #{tpu_custom_call.1} parent=31 // pred_check
          %p1274 = pneg %p106
        $region38: #{tpu_custom_call.1} parent=31 // pred_check_branch
          %1276 = sbr.rel (%p1274) target = $region40
        $region39: #{tpu_custom_call.1} parent=31 // pred_region
          %s1278 = ssub.s32 384, 384
          %1279 = vsyncadd %s1270, %s1278
          %s1280 = smul.addr %s20, 3
          %s1281 = smul.addr %s1280, 128
          %s1282 = scalar_lea.hbm %s3, %s1281
          %s1284 = sshll.u32 %s1273, 4
          %s1285 = int_to_ptr.vmem [resolvable:$true] %s1284
          %1287 = dma.vmem_to_hbm [thread:$0]  %s1285, 384, %s1282, %s1270
        $region40: #{tpu_custom_call.1} parent=31 // pred_fallthru
          _
      $region32: #{tpu_custom_call.1} parent=5 // pred_fallthru
        _
      %p1288 = scmp.le.s32.totalorder 2, %s15
      // Predicated region
      $region41: #{tpu_custom_call.1} parent=5 // pred_check
        %p1289 = pneg %p1288
      $region42: #{tpu_custom_call.1} parent=5 // pred_check_branch
        %1291 = sbr.rel (%p1289) target = $region44
      $region43: #{tpu_custom_call.1} parent=5 // pred_region
        %s1292 = ssub.s32 %s15, 2
        // Predicated region
        $region45: #{tpu_custom_call.1} parent=43 // pred_check
          %p1293 = pneg %p112
        $region46: #{tpu_custom_call.1} parent=43 // pred_check_branch
          %1295 = sbr.rel (%p1293) target = $region48
        $region47: #{tpu_custom_call.1} parent=43 // pred_region
          %s1296 = sand.u32 %s97, 1
          %s1297 = scalar_lea.sflag [#allocation4], %s1296
          %s1298 = sand.u32 %s97, 1
          %s1299 = smul.addr %s1298, 24
          %s1300 = scalar_lea.vmem [#allocation5], %s1299
          %1301 = dma.done %s1297, 384
        $region48: #{tpu_custom_call.1} parent=43 // pred_fallthru
          _
      $region44: #{tpu_custom_call.1} parent=5 // pred_fallthru
        _
    $region6: #{tpu_custom_call.1} parent=1 // loop_footer
      %s19 = sadd.s32 1, %s15
    $region7: #{tpu_custom_call.1} parent=1 // loop_footer_branch
      %14 = sbr.rel target = $region3
    $region8: #{tpu_custom_call.1} parent=1 // loop_exit
      _
    %1302 = vsyncpa [#allocation3], 1
    %s1303 = scalar_lea.sflag [#allocation3], 1
    %1304 = vsyncpa %s1303, 1
    %1305 = vsyncpa [#allocation4], 1
    %s1306 = scalar_lea.sflag [#allocation4], 1
    %1307 = vsyncpa %s1306, 1

</llo_original>
